<compile_context>
chip_gen: v7x
topology: tpu7x:2x2x1
jax: 0.10.0
libtpu: 0.0.40
codegen_flags: <defaults>
</compile_context>

<pallas_src>
import jax
import jax.numpy as jnp
from jax import lax
from jax.experimental import pallas as pl
from jax.experimental.pallas import tpu as pltpu

PACK = 64     # samples packed per lane-dense row (64 * 10 features = 640 = 5*128)
F_IN = 10
F_HID = 5


def simple_nn_kernel(x_ref, w1_ref, b1_ref, w2_ref, b2_ref, o_ref):
    # x_ref : (R, 640)   R packed rows, each = 64 samples x 10 features (lane-dense)
    # w1_ref: (640, 320) block-diagonal: 64 copies of W1[10,5] on the diagonal
    # b1_ref: (1, 320)   b1 tiled 64x
    # w2_ref: (320, 64)  block-diagonal: 64 copies of w2[5,1]
    # b2_ref: (1, 64)    b2 broadcast
    # o_ref : (R, 64)    64 samples per row (batch stays on the lane axis)
    x = x_ref[...]
    h = jnp.dot(x, w1_ref[...], preferred_element_type=jnp.float32) + b1_ref[...]
    h = jnp.maximum(h, 0.0)                                   # ReLU (VPU)
    z = jnp.dot(h, w2_ref[...], preferred_element_type=jnp.float32) + b2_ref[...]
    o_ref[...] = jax.nn.sigmoid(z).astype(o_ref.dtype)        # sigmoid (EUP)


def _round_up(a, m):
    return (a + m - 1) // m * m


def _block_diag_params(w1, b1, w2, b2):
    """Build the 64-way block-diagonal / tiled parameter forms (tiny, one-time)."""
    eye = jnp.eye(PACK, dtype=w1.dtype)
    w1_big = jnp.einsum("pq,io->piqo", eye, w1).reshape(PACK * F_IN, PACK * F_HID)
    w2_big = jnp.einsum("pq,io->piqo", eye, w2).reshape(PACK * F_HID, PACK)
    b1_big = jnp.tile(b1.reshape(1, F_HID), (1, PACK))        # (1, 320)
    b2_big = jnp.tile(b2.reshape(1, 1), (1, PACK))            # (1, 64)
    return w1_big, b1_big, w2_big, b2_big


def simple_nn_forward(x, w1, b1, w2, b2, *, tb_max=65536, min_pallas_batch=2048):
    """x: [B, 10] f32 -> [B, 1] f32.  w1 [10,5] (in-features first, i.e. torch W^T),
    b1 [1,5], w2 [5,1], b2 [1,1]."""
    B, f_in = x.shape
    assert f_in == F_IN and w1.shape == (F_IN, F_HID) and w2.shape == (F_HID, 1)

    # Small-batch fast path: kernel launch + DMA latency would dominate.
    if B < min_pallas_batch:
        h = jnp.maximum(x @ w1 + b1.reshape(1, F_HID), 0.0)
        return jax.nn.sigmoid(h @ w2 + b2.reshape(1, 1))

    # --- Batch-tile selection -----------------------------------------------
    # tb = samples per grid step; multiple of 512 (= 64 packed samples/row * 8
    # sublane rows).  Aim for >= 8 grid steps on large batches (megacore
    # balance / DMA-compute pipelining), cap at tb_max, keep the step count
    # even so both v7x TensorCores get whole, equal tiles.
    tb = max(512, min(_round_up(tb_max, 512), _round_up(pl.cdiv(B, 8), 512)))
    steps = pl.cdiv(B, tb)
    if steps > 1 and steps % 2:
        steps += 1
    b_pad = steps * tb
    if b_pad != B:
        x = jnp.pad(x, ((0, b_pad - B), (0, 0)))

    # Zero-copy lane-dense presentation: 64 samples per 640-wide (5*128) row.
    x_packed = x.reshape(b_pad // PACK, PACK * F_IN)
    w1_big, b1_big, w2_big, b2_big = _block_diag_params(w1, b1, w2, b2)

    r = tb // PACK   # packed rows per grid step (multiple of 8)

    out = pl.pallas_call(
        simple_nn_kernel,
        out_shape=jax.ShapeDtypeStruct((b_pad // PACK, PACK), jnp.float32),
        grid_spec=pltpu.PrefetchScalarGridSpec(
            num_scalar_prefetch=0,
            grid=(steps,),
            in_specs=[
                pl.BlockSpec((r, PACK * F_IN), lambda i: (i, 0)),          # x tiles
                pl.BlockSpec((PACK * F_IN, PACK * F_HID), lambda i: (0, 0)),  # W1 blkdiag
                pl.BlockSpec((1, PACK * F_HID), lambda i: (0, 0)),            # b1
                pl.BlockSpec((PACK * F_HID, PACK), lambda i: (0, 0)),          # W2 blkdiag
                pl.BlockSpec((1, PACK), lambda i: (0, 0)),                     # b2
            ],
            out_specs=pl.BlockSpec((r, PACK), lambda i: (i, 0)),
        ),
        compiler_params=pltpu.CompilerParams(
            dimension_semantics=("parallel",),      # shard batch steps across TCs (v7x)
            vmem_limit_bytes=32 * 1024 * 1024,      # > v5e's 16 MiB default scoped limit
        ),
        cost_estimate=pl.CostEstimate(
            flops=(2 * PACK * F_IN * PACK * F_HID + 2 * PACK * F_HID * PACK)
                  * (b_pad // PACK),
            transcendentals=b_pad,
            bytes_accessed=44 * b_pad
            + 4 * (w1_big.size + b1_big.size + w2_big.size + b2_big.size),
        ),
    )(x_packed, w1_big, b1_big, w2_big, b2_big)

    return out.reshape(b_pad, 1)[:B]


def init_params(key):
    """fc1: Linear(10,5) -> W1 [10,5] (transposed vs torch), b1 [1,5]
       fc2: Linear(5,1)  -> W2 [5,1],  b2 [1,1]   (torch-default uniform init)."""
    k1, k2, k3, k4 = jax.random.split(key, 4)
    bound1 = 1.0 / jnp.sqrt(10.0)
    bound2 = 1.0 / jnp.sqrt(5.0)
    w1 = jax.random.uniform(k1, (10, 5), jnp.float32, -bound1, bound1)
    b1 = jax.random.uniform(k2, (1, 5), jnp.float32, -bound1, bound1)
    w2 = jax.random.uniform(k3, (5, 1), jnp.float32, -bound2, bound2)
    b2 = jax.random.uniform(k4, (1, 1), jnp.float32, -bound2, bound2)
    return w1, b1, w2, b2


if __name__ == "__main__":
    key = jax.random.PRNGKey(0)
    kx, kp, kx2 = jax.random.split(key, 3)
    w1, b1, w2, b2 = init_params(kp)

    def reference(xv):
        h = jnp.maximum(jnp.dot(xv, w1, precision=lax.Precision.HIGHEST) + b1, 0.0)
        return jax.nn.sigmoid(jnp.dot(h, w2, precision=lax.Precision.HIGHEST) + b2)

    # Small shape, forced through the Pallas path (single grid step, padded batch).
    B = 256
    x = jax.random.normal(kx, (B, F_IN), jnp.float32)
    out = jax.block_until_ready(
        simple_nn_forward(x, w1, b1, w2, b2, min_pallas_batch=0))
    assert out.shape == (B, 1)
    assert jnp.allclose(out, reference(x), atol=2e-3, rtol=1e-3)

    # Multi-step grid (8 steps of 512 samples): exercises the pipelined /
    # megacore path and the packed lane-dense reshape with no padding.
    B2 = 4096
    x2 = jax.random.normal(kx2, (B2, F_IN), jnp.float32)
    out2 = jax.block_until_ready(simple_nn_forward(x2, w1, b1, w2, b2))
    assert out2.shape == (B2, 1)
    assert jnp.allclose(out2, reference(x2), atol=2e-3, rtol=1e-3)

    print("KERNEL_OK")
</pallas_src>

<mosaic_0001>
module attributes {stable_mosaic.version = 11 : i64} {
  func.func @simple_nn_kernel(%arg0: i32, %arg1: memref<8x640xf32, #tpu.memory_space<vmem>>, %arg2: memref<640x320xf32, #tpu.memory_space<vmem>>, %arg3: memref<1x320xf32, #tpu.memory_space<vmem>>, %arg4: memref<320x64xf32, #tpu.memory_space<vmem>>, %arg5: memref<1x64xf32, #tpu.memory_space<vmem>>, %arg6: memref<8x64xf32, #tpu.memory_space<vmem>>) attributes {dimension_semantics = [#tpu.dimension_semantics<parallel>], iteration_bounds = array<i64: 1>, scalar_prefetch = 0 : i64, scratch_operands = 0 : i64, tpu.core_type = #tpu.core_type<tc>, window_params = [{transform_indices = @transform_0, window_bounds = array<i64: 8, 640>}, {pipeline_mode = #tpu.pipeline_mode<synchronous>, transform_indices = @transform_1, window_bounds = array<i64: 640, 320>}, {pipeline_mode = #tpu.pipeline_mode<synchronous>, transform_indices = @transform_2, window_bounds = array<i64: 1, 320>}, {pipeline_mode = #tpu.pipeline_mode<synchronous>, transform_indices = @transform_3, window_bounds = array<i64: 320, 64>}, {pipeline_mode = #tpu.pipeline_mode<synchronous>, transform_indices = @transform_4, window_bounds = array<i64: 1, 64>}, {transform_indices = @transform_5, window_bounds = array<i64: 8, 64>}]} {
    %c0 = arith.constant 0 : index
    %c0_0 = arith.constant 0 : index
    %0 = vector.load %arg1[%c0, %c0_0] : memref<8x640xf32, #tpu.memory_space<vmem>>, vector<8x640xf32>
    %c0_1 = arith.constant 0 : index
    %c0_2 = arith.constant 0 : index
    %1 = vector.load %arg2[%c0_1, %c0_2] : memref<640x320xf32, #tpu.memory_space<vmem>>, vector<640x320xf32>
    %cst = arith.constant dense<0.000000e+00> : vector<8x320xf32>
    %2 = tpu.matmul %0, %1, %cst {dimension_numbers = #tpu.dot_dimension_numbers<[1], [0], [0], [1], [0, 0, 1, 1], [], []>} : vector<8x640xf32>, vector<640x320xf32>, vector<8x320xf32> -> vector<8x320xf32>
    %c0_3 = arith.constant 0 : index
    %c0_4 = arith.constant 0 : index
    %3 = vector.load %arg3[%c0_3, %c0_4] : memref<1x320xf32, #tpu.memory_space<vmem>>, vector<1x320xf32>
    %4 = vector.broadcast %3 : vector<1x320xf32> to vector<8x320xf32>
    %5 = arith.addf %2, %4 : vector<8x320xf32>
    %cst_5 = arith.constant 0.000000e+00 : f32
    %6 = vector.broadcast %cst_5 : f32 to vector<8x320xf32>
    %7 = arith.maximumf %5, %6 : vector<8x320xf32>
    %c0_6 = arith.constant 0 : index
    %c0_7 = arith.constant 0 : index
    %8 = vector.load %arg4[%c0_6, %c0_7] : memref<320x64xf32, #tpu.memory_space<vmem>>, vector<320x64xf32>
    %cst_8 = arith.constant dense<0.000000e+00> : vector<8x64xf32>
    %9 = tpu.matmul %7, %8, %cst_8 {dimension_numbers = #tpu.dot_dimension_numbers<[1], [0], [0], [1], [0, 0, 1, 1], [], []>} : vector<8x320xf32>, vector<320x64xf32>, vector<8x64xf32> -> vector<8x64xf32>
    %c0_9 = arith.constant 0 : index
    %c0_10 = arith.constant 0 : index
    %10 = vector.load %arg5[%c0_9, %c0_10] : memref<1x64xf32, #tpu.memory_space<vmem>>, vector<1x64xf32>
    %11 = vector.broadcast %10 : vector<1x64xf32> to vector<8x64xf32>
    %12 = arith.addf %9, %11 : vector<8x64xf32>
    %13 = arith.negf %12 : vector<8x64xf32>
    %14 = math.exp %13 : vector<8x64xf32>
    %cst_11 = arith.constant 1.000000e+00 : f32
    %15 = vector.broadcast %cst_11 : f32 to vector<8x64xf32>
    %16 = arith.addf %15, %14 : vector<8x64xf32>
    %17 = arith.divf %15, %16 : vector<8x64xf32>
    %c0_12 = arith.constant 0 : index
    %c0_13 = arith.constant 0 : index
    %18 = vector.load %arg6[%c0_12, %c0_13] : memref<8x64xf32, #tpu.memory_space<vmem>>, vector<8x64xf32>
    tpu.vector_store %arg6[%c0_12, %c0_13], %17 {strides = array<i32>} : memref<8x64xf32, #tpu.memory_space<vmem>>, vector<8x64xf32>,
    return
  }
  func.func @transform_0(%arg0: i32) -> (i32, i32) {
    %c0_i32 = arith.constant 0 : i32
    %c0_i32_0 = arith.constant 0 : i32
    return %arg0, %c0_i32 : i32, i32
  }
  func.func @transform_1(%arg0: i32) -> (i32, i32) {
    %c0_i32 = arith.constant 0 : i32
    %c0_i32_0 = arith.constant 0 : i32
    %c0_i32_1 = arith.constant 0 : i32
    return %c0_i32, %c0_i32_0 : i32, i32
  }
  func.func @transform_2(%arg0: i32) -> (i32, i32) {
    %c0_i32 = arith.constant 0 : i32
    %c0_i32_0 = arith.constant 0 : i32
    %c0_i32_1 = arith.constant 0 : i32
    return %c0_i32, %c0_i32_0 : i32, i32
  }
  func.func @transform_3(%arg0: i32) -> (i32, i32) {
    %c0_i32 = arith.constant 0 : i32
    %c0_i32_0 = arith.constant 0 : i32
    %c0_i32_1 = arith.constant 0 : i32
    return %c0_i32, %c0_i32_0 : i32, i32
  }
  func.func @transform_4(%arg0: i32) -> (i32, i32) {
    %c0_i32 = arith.constant 0 : i32
    %c0_i32_0 = arith.constant 0 : i32
    %c0_i32_1 = arith.constant 0 : i32
    return %c0_i32, %c0_i32_0 : i32, i32
  }
  func.func @transform_5(%arg0: i32) -> (i32, i32) {
    %c0_i32 = arith.constant 0 : i32
    %c0_i32_0 = arith.constant 0 : i32
    return %arg0, %c0_i32 : i32, i32
  }
}

</mosaic_0001>

<llo_original>
// kernel: tpu_custom_call.1
$region0: #{tpu_custom_call.1}
  #allocation0 [shape = 'u32[]', space=smem, size = 0x4, offset = 0x4, fixed_abs, tag = 'smem constant byte address 0x4 - core index']
  #allocation1 [shape = 'u32[144,128]{1,0:T(1,128)}', space=vmem, size = 0x12000, scoped, tag = 'internal scratch']
  %s0 = inlined_call_operand.vmem [shape: f32[8,640], index: 0, kind: input, shape index: {}]
  %s1 = inlined_call_operand.vmem [shape: f32[640,320], index: 1, kind: input, shape index: {}]
  %s2 = inlined_call_operand.vmem [shape: f32[1,320], index: 2, kind: input, shape index: {}]
  %s3 = inlined_call_operand.vmem [shape: f32[320,64], index: 3, kind: input, shape index: {}]
  %s4 = inlined_call_operand.vmem [shape: f32[1,64], index: 4, kind: input, shape index: {}]
  %s5 = inlined_call_operand.hbm [shape: f32[8,64], index: 5, kind: output, shape index: {}]
  %s6 = sld [smem:[#allocation0]]
  $region30: #{tpu_custom_call.1} parent=0
    _
  %s8 = ssub.s32 1, %s6
  %s9 = scalar_select 0, %s8, %s6
  $region1: #{tpu_custom_call.1} parent=0
    #allocation2 [shape = 'u8[4096]{0}', space=vmem, size = 0x1000, scoped, tag = 'output window, operand 0, single buffered']
    #allocation3 [shape = 's32[1]{0}', space=sflag, size = 0x4, scoped, tag = 'scoped memory for tpu_custom_call.1']
    %10 = vsyncpa [#allocation3], 0
    // Predicated region
    $region2: #{tpu_custom_call.1} parent=1 // pred_check
      _
    $region3: #{tpu_custom_call.1} parent=1 // pred_check_branch
      %12 = sbr.rel (0) target = $region5
    $region4: #{tpu_custom_call.1} parent=1 // pred_region
      _
    $region5: #{tpu_custom_call.1} parent=1 // pred_fallthru
      _
    // Predicated region
    $region6: #{tpu_custom_call.1} parent=1 // pred_check
      _
    $region7: #{tpu_custom_call.1} parent=1 // pred_check_branch
      %14 = sbr.rel (0) target = $region9
    $region8: #{tpu_custom_call.1} parent=1 // pred_region
      _
    $region9: #{tpu_custom_call.1} parent=1 // pred_fallthru
      _
    // Predicated region
    $region10: #{tpu_custom_call.1} parent=1 // pred_check
      _
    $region11: #{tpu_custom_call.1} parent=1 // pred_check_branch
      %16 = sbr.rel (0) target = $region13
    $region12: #{tpu_custom_call.1} parent=1 // pred_region
      _
    $region13: #{tpu_custom_call.1} parent=1 // pred_fallthru
      _
    // Predicated region
    $region14: #{tpu_custom_call.1} parent=1 // pred_check
      _
    $region15: #{tpu_custom_call.1} parent=1 // pred_check_branch
      %18 = sbr.rel (0) target = $region17
    $region16: #{tpu_custom_call.1} parent=1 // pred_region
      _
    $region17: #{tpu_custom_call.1} parent=1 // pred_fallthru
      _
    // Predicated region
    $region18: #{tpu_custom_call.1} parent=1 // pred_check
      _
    $region19: #{tpu_custom_call.1} parent=1 // pred_check_branch
      %20 = sbr.rel (0) target = $region21
    $region20: #{tpu_custom_call.1} parent=1 // pred_region
      _
    $region21: #{tpu_custom_call.1} parent=1 // pred_fallthru
      _
    %v21 = vld [vmem:[%s0] sm:$0xff]
    %v22 = vld [vmem:[%s0 + $0x8] sm:$0xff]
    %v23 = vld [vmem:[%s0 + $0x10] sm:$0xff]
    %v24 = vld [vmem:[%s0 + $0x18] sm:$0xff]
    %v25 = vld [vmem:[%s0 + $0x20] sm:$0xff]
    %v26 = vld [vmem:[%s1] sm:$0xff]
    %v27 = vld [vmem:[%s1 + $0x8] sm:$0xff]
    %v28 = vld [vmem:[%s1 + $0x10] sm:$0xff]
    %v29 = vld [vmem:[%s1 + $0x18] sm:$0xff]
    %v30 = vld [vmem:[%s1 + $0x20] sm:$0xff]
    %v31 = vld [vmem:[%s1 + $0x28] sm:$0xff]
    %v32 = vld [vmem:[%s1 + $0x30] sm:$0xff]
    %v33 = vld [vmem:[%s1 + $0x38] sm:$0xff]
    %v34 = vld [vmem:[%s1 + $0x40] sm:$0xff]
    %v35 = vld [vmem:[%s1 + $0x48] sm:$0xff]
    %v36 = vld [vmem:[%s1 + $0x50] sm:$0xff]
    %v37 = vld [vmem:[%s1 + $0x58] sm:$0xff]
    %v38 = vld [vmem:[%s1 + $0x60] sm:$0xff]
    %v39 = vld [vmem:[%s1 + $0x68] sm:$0xff]
    %v40 = vld [vmem:[%s1 + $0x70] sm:$0xff]
    %v41 = vld [vmem:[%s1 + $0x78] sm:$0xff]
    %v42 = vld [vmem:[%s1 + $0x80] sm:$0xff]
    %v43 = vld [vmem:[%s1 + $0x88] sm:$0xff]
    %v44 = vld [vmem:[%s1 + $0x90] sm:$0xff]
    %v45 = vld [vmem:[%s1 + $0x98] sm:$0xff]
    %v46 = vld [vmem:[%s1 + $0xa0] sm:$0xff]
    %v47 = vld [vmem:[%s1 + $0xa8] sm:$0xff]
    %v48 = vld [vmem:[%s1 + $0xb0] sm:$0xff]
    %v49 = vld [vmem:[%s1 + $0xb8] sm:$0xff]
    %v50 = vld [vmem:[%s1 + $0xc0] sm:$0xff]
    %v51 = vld [vmem:[%s1 + $0xc8] sm:$0xff]
    %v52 = vld [vmem:[%s1 + $0xd0] sm:$0xff]
    %v53 = vld [vmem:[%s1 + $0xd8] sm:$0xff]
    %v54 = vld [vmem:[%s1 + $0xe0] sm:$0xff]
    %v55 = vld [vmem:[%s1 + $0xe8] sm:$0xff]
    %v56 = vld [vmem:[%s1 + $0xf0] sm:$0xff]
    %v57 = vld [vmem:[%s1 + $0xf8] sm:$0xff]
    %v58 = vld [vmem:[%s1 + $0x100] sm:$0xff]
    %v59 = vld [vmem:[%s1 + $0x108] sm:$0xff]
    %v60 = vld [vmem:[%s1 + $0x110] sm:$0xff]
    %v61 = vld [vmem:[%s1 + $0x118] sm:$0xff]
    %v62 = vld [vmem:[%s1 + $0x120] sm:$0xff]
    %v63 = vld [vmem:[%s1 + $0x128] sm:$0xff]
    %v64 = vld [vmem:[%s1 + $0x130] sm:$0xff]
    %v65 = vld [vmem:[%s1 + $0x138] sm:$0xff]
    %v66 = vld [vmem:[%s1 + $0x140] sm:$0xff]
    %v67 = vld [vmem:[%s1 + $0x148] sm:$0xff]
    %v68 = vld [vmem:[%s1 + $0x150] sm:$0xff]
    %v69 = vld [vmem:[%s1 + $0x158] sm:$0xff]
    %v70 = vld [vmem:[%s1 + $0x160] sm:$0xff]
    %v71 = vld [vmem:[%s1 + $0x168] sm:$0xff]
    %v72 = vld [vmem:[%s1 + $0x170] sm:$0xff]
    %v73 = vld [vmem:[%s1 + $0x178] sm:$0xff]
    %v74 = vld [vmem:[%s1 + $0x180] sm:$0xff]
    %v75 = vld [vmem:[%s1 + $0x188] sm:$0xff]
    %v76 = vld [vmem:[%s1 + $0x190] sm:$0xff]
    %v77 = vld [vmem:[%s1 + $0x198] sm:$0xff]
    %v78 = vld [vmem:[%s1 + $0x1a0] sm:$0xff]
    %v79 = vld [vmem:[%s1 + $0x1a8] sm:$0xff]
    %v80 = vld [vmem:[%s1 + $0x1b0] sm:$0xff]
    %v81 = vld [vmem:[%s1 + $0x1b8] sm:$0xff]
    %v82 = vld [vmem:[%s1 + $0x1c0] sm:$0xff]
    %v83 = vld [vmem:[%s1 + $0x1c8] sm:$0xff]
    %v84 = vld [vmem:[%s1 + $0x1d0] sm:$0xff]
    %v85 = vld [vmem:[%s1 + $0x1d8] sm:$0xff]
    %v86 = vld [vmem:[%s1 + $0x1e0] sm:$0xff]
    %v87 = vld [vmem:[%s1 + $0x1e8] sm:$0xff]
    %v88 = vld [vmem:[%s1 + $0x1f0] sm:$0xff]
    %v89 = vld [vmem:[%s1 + $0x1f8] sm:$0xff]
    %v90 = vld [vmem:[%s1 + $0x200] sm:$0xff]
    %v91 = vld [vmem:[%s1 + $0x208] sm:$0xff]
    %v92 = vld [vmem:[%s1 + $0x210] sm:$0xff]
    %v93 = vld [vmem:[%s1 + $0x218] sm:$0xff]
    %v94 = vld [vmem:[%s1 + $0x220] sm:$0xff]
    %v95 = vld [vmem:[%s1 + $0x228] sm:$0xff]
    %v96 = vld [vmem:[%s1 + $0x230] sm:$0xff]
    %v97 = vld [vmem:[%s1 + $0x238] sm:$0xff]
    %v98 = vld [vmem:[%s1 + $0x240] sm:$0xff]
    %v99 = vld [vmem:[%s1 + $0x248] sm:$0xff]
    %v100 = vld [vmem:[%s1 + $0x250] sm:$0xff]
    %v101 = vld [vmem:[%s1 + $0x258] sm:$0xff]
    %v102 = vld [vmem:[%s1 + $0x260] sm:$0xff]
    %v103 = vld [vmem:[%s1 + $0x268] sm:$0xff]
    %v104 = vld [vmem:[%s1 + $0x270] sm:$0xff]
    %v105 = vld [vmem:[%s1 + $0x278] sm:$0xff]
    %v106 = vld [vmem:[%s1 + $0x280] sm:$0xff]
    %v107 = vld [vmem:[%s1 + $0x288] sm:$0xff]
    %v108 = vld [vmem:[%s1 + $0x290] sm:$0xff]
    %v109 = vld [vmem:[%s1 + $0x298] sm:$0xff]
    %v110 = vld [vmem:[%s1 + $0x2a0] sm:$0xff]
    %v111 = vld [vmem:[%s1 + $0x2a8] sm:$0xff]
    %v112 = vld [vmem:[%s1 + $0x2b0] sm:$0xff]
    %v113 = vld [vmem:[%s1 + $0x2b8] sm:$0xff]
    %v114 = vld [vmem:[%s1 + $0x2c0] sm:$0xff]
    %v115 = vld [vmem:[%s1 + $0x2c8] sm:$0xff]
    %v116 = vld [vmem:[%s1 + $0x2d0] sm:$0xff]
    %v117 = vld [vmem:[%s1 + $0x2d8] sm:$0xff]
    %v118 = vld [vmem:[%s1 + $0x2e0] sm:$0xff]
    %v119 = vld [vmem:[%s1 + $0x2e8] sm:$0xff]
    %v120 = vld [vmem:[%s1 + $0x2f0] sm:$0xff]
    %v121 = vld [vmem:[%s1 + $0x2f8] sm:$0xff]
    %v122 = vld [vmem:[%s1 + $0x300] sm:$0xff]
    %v123 = vld [vmem:[%s1 + $0x308] sm:$0xff]
    %v124 = vld [vmem:[%s1 + $0x310] sm:$0xff]
    %v125 = vld [vmem:[%s1 + $0x318] sm:$0xff]
    %v126 = vld [vmem:[%s1 + $0x320] sm:$0xff]
    %v127 = vld [vmem:[%s1 + $0x328] sm:$0xff]
    %v128 = vld [vmem:[%s1 + $0x330] sm:$0xff]
    %v129 = vld [vmem:[%s1 + $0x338] sm:$0xff]
    %v130 = vld [vmem:[%s1 + $0x340] sm:$0xff]
    %v131 = vld [vmem:[%s1 + $0x348] sm:$0xff]
    %v132 = vld [vmem:[%s1 + $0x350] sm:$0xff]
    %v133 = vld [vmem:[%s1 + $0x358] sm:$0xff]
    %v134 = vld [vmem:[%s1 + $0x360] sm:$0xff]
    %v135 = vld [vmem:[%s1 + $0x368] sm:$0xff]
    %v136 = vld [vmem:[%s1 + $0x370] sm:$0xff]
    %v137 = vld [vmem:[%s1 + $0x378] sm:$0xff]
    %v138 = vld [vmem:[%s1 + $0x380] sm:$0xff]
    %v139 = vld [vmem:[%s1 + $0x388] sm:$0xff]
    %v140 = vld [vmem:[%s1 + $0x390] sm:$0xff]
    %v141 = vld [vmem:[%s1 + $0x398] sm:$0xff]
    %v142 = vld [vmem:[%s1 + $0x3a0] sm:$0xff]
    %v143 = vld [vmem:[%s1 + $0x3a8] sm:$0xff]
    %v144 = vld [vmem:[%s1 + $0x3b0] sm:$0xff]
    %v145 = vld [vmem:[%s1 + $0x3b8] sm:$0xff]
    %v146 = vld [vmem:[%s1 + $0x3c0] sm:$0xff]
    %v147 = vld [vmem:[%s1 + $0x3c8] sm:$0xff]
    %v148 = vld [vmem:[%s1 + $0x3d0] sm:$0xff]
    %v149 = vld [vmem:[%s1 + $0x3d8] sm:$0xff]
    %v150 = vld [vmem:[%s1 + $0x3e0] sm:$0xff]
    %v151 = vld [vmem:[%s1 + $0x3e8] sm:$0xff]
    %v152 = vld [vmem:[%s1 + $0x3f0] sm:$0xff]
    %v153 = vld [vmem:[%s1 + $0x3f8] sm:$0xff]
    %v154 = vld [vmem:[%s1 + $0x400] sm:$0xff]
    %v155 = vld [vmem:[%s1 + $0x408] sm:$0xff]
    %v156 = vld [vmem:[%s1 + $0x410] sm:$0xff]
    %v157 = vld [vmem:[%s1 + $0x418] sm:$0xff]
    %v158 = vld [vmem:[%s1 + $0x420] sm:$0xff]
    %v159 = vld [vmem:[%s1 + $0x428] sm:$0xff]
    %v160 = vld [vmem:[%s1 + $0x430] sm:$0xff]
    %v161 = vld [vmem:[%s1 + $0x438] sm:$0xff]
    %v162 = vld [vmem:[%s1 + $0x440] sm:$0xff]
    %v163 = vld [vmem:[%s1 + $0x448] sm:$0xff]
    %v164 = vld [vmem:[%s1 + $0x450] sm:$0xff]
    %v165 = vld [vmem:[%s1 + $0x458] sm:$0xff]
    %v166 = vld [vmem:[%s1 + $0x460] sm:$0xff]
    %v167 = vld [vmem:[%s1 + $0x468] sm:$0xff]
    %v168 = vld [vmem:[%s1 + $0x470] sm:$0xff]
    %v169 = vld [vmem:[%s1 + $0x478] sm:$0xff]
    %v170 = vld [vmem:[%s1 + $0x480] sm:$0xff]
    %v171 = vld [vmem:[%s1 + $0x488] sm:$0xff]
    %v172 = vld [vmem:[%s1 + $0x490] sm:$0xff]
    %v173 = vld [vmem:[%s1 + $0x498] sm:$0xff]
    %v174 = vld [vmem:[%s1 + $0x4a0] sm:$0xff]
    %v175 = vld [vmem:[%s1 + $0x4a8] sm:$0xff]
    %v176 = vld [vmem:[%s1 + $0x4b0] sm:$0xff]
    %v177 = vld [vmem:[%s1 + $0x4b8] sm:$0xff]
    %v178 = vld [vmem:[%s1 + $0x4c0] sm:$0xff]
    %v179 = vld [vmem:[%s1 + $0x4c8] sm:$0xff]
    %v180 = vld [vmem:[%s1 + $0x4d0] sm:$0xff]
    %v181 = vld [vmem:[%s1 + $0x4d8] sm:$0xff]
    %v182 = vld [vmem:[%s1 + $0x4e0] sm:$0xff]
    %v183 = vld [vmem:[%s1 + $0x4e8] sm:$0xff]
    %v184 = vld [vmem:[%s1 + $0x4f0] sm:$0xff]
    %v185 = vld [vmem:[%s1 + $0x4f8] sm:$0xff]
    %v186 = vld [vmem:[%s1 + $0x500] sm:$0xff]
    %v187 = vld [vmem:[%s1 + $0x508] sm:$0xff]
    %v188 = vld [vmem:[%s1 + $0x510] sm:$0xff]
    %v189 = vld [vmem:[%s1 + $0x518] sm:$0xff]
    %v190 = vld [vmem:[%s1 + $0x520] sm:$0xff]
    %v191 = vld [vmem:[%s1 + $0x528] sm:$0xff]
    %v192 = vld [vmem:[%s1 + $0x530] sm:$0xff]
    %v193 = vld [vmem:[%s1 + $0x538] sm:$0xff]
    %v194 = vld [vmem:[%s1 + $0x540] sm:$0xff]
    %v195 = vld [vmem:[%s1 + $0x548] sm:$0xff]
    %v196 = vld [vmem:[%s1 + $0x550] sm:$0xff]
    %v197 = vld [vmem:[%s1 + $0x558] sm:$0xff]
    %v198 = vld [vmem:[%s1 + $0x560] sm:$0xff]
    %v199 = vld [vmem:[%s1 + $0x568] sm:$0xff]
    %v200 = vld [vmem:[%s1 + $0x570] sm:$0xff]
    %v201 = vld [vmem:[%s1 + $0x578] sm:$0xff]
    %v202 = vld [vmem:[%s1 + $0x580] sm:$0xff]
    %v203 = vld [vmem:[%s1 + $0x588] sm:$0xff]
    %v204 = vld [vmem:[%s1 + $0x590] sm:$0xff]
    %v205 = vld [vmem:[%s1 + $0x598] sm:$0xff]
    %v206 = vld [vmem:[%s1 + $0x5a0] sm:$0xff]
    %v207 = vld [vmem:[%s1 + $0x5a8] sm:$0xff]
    %v208 = vld [vmem:[%s1 + $0x5b0] sm:$0xff]
    %v209 = vld [vmem:[%s1 + $0x5b8] sm:$0xff]
    %v210 = vld [vmem:[%s1 + $0x5c0] sm:$0xff]
    %v211 = vld [vmem:[%s1 + $0x5c8] sm:$0xff]
    %v212 = vld [vmem:[%s1 + $0x5d0] sm:$0xff]
    %v213 = vld [vmem:[%s1 + $0x5d8] sm:$0xff]
    %v214 = vld [vmem:[%s1 + $0x5e0] sm:$0xff]
    %v215 = vld [vmem:[%s1 + $0x5e8] sm:$0xff]
    %v216 = vld [vmem:[%s1 + $0x5f0] sm:$0xff]
    %v217 = vld [vmem:[%s1 + $0x5f8] sm:$0xff]
    %v218 = vld [vmem:[%s1 + $0x600] sm:$0xff]
    %v219 = vld [vmem:[%s1 + $0x608] sm:$0xff]
    %v220 = vld [vmem:[%s1 + $0x610] sm:$0xff]
    %v221 = vld [vmem:[%s1 + $0x618] sm:$0xff]
    %v222 = vld [vmem:[%s1 + $0x620] sm:$0xff]
    %v223 = vld [vmem:[%s1 + $0x628] sm:$0xff]
    %v224 = vld [vmem:[%s1 + $0x630] sm:$0xff]
    %v225 = vld [vmem:[%s1 + $0x638] sm:$0xff]
    %v226 = vld [vmem:[%s1 + $0x640] sm:$0xff]
    %v227 = vld [vmem:[%s1 + $0x648] sm:$0xff]
    %v228 = vld [vmem:[%s1 + $0x650] sm:$0xff]
    %v229 = vld [vmem:[%s1 + $0x658] sm:$0xff]
    %v230 = vld [vmem:[%s1 + $0x660] sm:$0xff]
    %v231 = vld [vmem:[%s1 + $0x668] sm:$0xff]
    %v232 = vld [vmem:[%s1 + $0x670] sm:$0xff]
    %v233 = vld [vmem:[%s1 + $0x678] sm:$0xff]
    %v234 = vld [vmem:[%s1 + $0x680] sm:$0xff]
    %v235 = vld [vmem:[%s1 + $0x688] sm:$0xff]
    %v236 = vld [vmem:[%s1 + $0x690] sm:$0xff]
    %v237 = vld [vmem:[%s1 + $0x698] sm:$0xff]
    %v238 = vld [vmem:[%s1 + $0x6a0] sm:$0xff]
    %v239 = vld [vmem:[%s1 + $0x6a8] sm:$0xff]
    %v240 = vld [vmem:[%s1 + $0x6b0] sm:$0xff]
    %v241 = vld [vmem:[%s1 + $0x6b8] sm:$0xff]
    %v242 = vld [vmem:[%s1 + $0x6c0] sm:$0xff]
    %v243 = vld [vmem:[%s1 + $0x6c8] sm:$0xff]
    %v244 = vld [vmem:[%s1 + $0x6d0] sm:$0xff]
    %v245 = vld [vmem:[%s1 + $0x6d8] sm:$0xff]
    %v246 = vld [vmem:[%s1 + $0x6e0] sm:$0xff]
    %v247 = vld [vmem:[%s1 + $0x6e8] sm:$0xff]
    %v248 = vld [vmem:[%s1 + $0x6f0] sm:$0xff]
    %v249 = vld [vmem:[%s1 + $0x6f8] sm:$0xff]
    %v250 = vld [vmem:[%s1 + $0x700] sm:$0xff]
    %v251 = vld [vmem:[%s1 + $0x708] sm:$0xff]
    %v252 = vld [vmem:[%s1 + $0x710] sm:$0xff]
    %v253 = vld [vmem:[%s1 + $0x718] sm:$0xff]
    %v254 = vld [vmem:[%s1 + $0x720] sm:$0xff]
    %v255 = vld [vmem:[%s1 + $0x728] sm:$0xff]
    %v256 = vld [vmem:[%s1 + $0x730] sm:$0xff]
    %v257 = vld [vmem:[%s1 + $0x738] sm:$0xff]
    %v258 = vld [vmem:[%s1 + $0x740] sm:$0xff]
    %v259 = vld [vmem:[%s1 + $0x748] sm:$0xff]
    %v260 = vld [vmem:[%s1 + $0x750] sm:$0xff]
    %v261 = vld [vmem:[%s1 + $0x758] sm:$0xff]
    %v262 = vld [vmem:[%s1 + $0x760] sm:$0xff]
    %v263 = vld [vmem:[%s1 + $0x768] sm:$0xff]
    %v264 = vld [vmem:[%s1 + $0x770] sm:$0xff]
    %v265 = vld [vmem:[%s1 + $0x778] sm:$0xff]
    %v266 = vld [vmem:[%s2] sm:$0x7]
    %v268 = vlaneseq
    %v269 = vshrl.u32 %v268, 7
    %v270 = vsub.s32 0, %v269
    %v271 = vrot.slane %v266, %v270
    %v272 = vlaneseq
    %v273 = vshrl.u32 %v272, 7
    %v274 = vsub.s32 1, %v273
    %v275 = vrot.slane %v266, %v274
    %v276 = vlaneseq
    %v277 = vshrl.u32 %v276, 7
    %v278 = vsub.s32 2, %v277
    %v279 = vrot.slane %v266, %v278
    %283 = vmatprep.subr.mxu0 %v27
    %284 = vmatpush1.msra.mxu0 %v26
    %285 = vmatprep.subr.mxu0 %v30
    %286 = vmatpush1.msra.mxu0 %v29
    %287 = vmatprep.subr.mxu0 %v33
    %288 = vmatpush1.msra.mxu0 %v32
    %289 = vmatprep.subr.mxu0 %v36
    %290 = vmatpush1.msra.mxu0 %v35
    %291 = vmatprep.subr.mxu0 %v39
    %292 = vmatpush1.msra.mxu0 %v38
    %293 = vmatprep.subr.mxu0 %v42
    %294 = vmatpush1.msra.mxu0 %v41
    %295 = vmatprep.subr.mxu0 %v45
    %296 = vmatpush1.msra.mxu0 %v44
    %297 = vmatprep.subr.mxu0 %v48
    %298 = vmatpush1.msra.mxu0 %v47
    %299 = vmatprep.subr.mxu0 %v51
    %300 = vmatpush1.msra.mxu0 %v50
    %301 = vmatprep.subr.mxu0 %v54
    %302 = vmatpush1.msra.mxu0 %v53
    %303 = vmatprep.subr.mxu0 %v57
    %304 = vmatpush1.msra.mxu0 %v56
    %305 = vmatprep.subr.mxu0 %v60
    %306 = vmatpush1.msra.mxu0 %v59
    %307 = vmatprep.subr.mxu0 %v63
    %308 = vmatpush1.msra.mxu0 %v62
    %309 = vmatprep.subr.mxu0 %v66
    %310 = vmatpush1.msra.mxu0 %v65
    %311 = vmatprep.subr.mxu0 %v69
    %312 = vmatpush1.msra.mxu0 %v68
    %313 = vmatprep.subr.mxu0 %v72
    %314 = vmatpush1.msra.mxu0 %v71
    %315 = vmatprep.subr.mxu0 %v75
    %316 = vmatpush1.msra.mxu0 %v74
    %317 = vmatprep.subr.mxu0 %v78
    %318 = vmatpush1.msra.mxu0 %v77
    %319 = vmatprep.subr.mxu0 %v81
    %320 = vmatpush1.msra.mxu0 %v80
    %321 = vmatprep.subr.mxu0 %v84
    %322 = vmatpush1.msra.mxu0 %v83
    %323 = vmatprep.subr.mxu0 %v87
    %324 = vmatpush1.msra.mxu0 %v86
    %325 = vmatprep.subr.mxu0 %v90
    %326 = vmatpush1.msra.mxu0 %v89
    %327 = vmatprep.subr.mxu0 %v93
    %328 = vmatpush1.msra.mxu0 %v92
    %329 = vmatprep.subr.mxu0 %v96
    %330 = vmatpush1.msra.mxu0 %v95
    %331 = vmatprep.subr.mxu0 %v99
    %332 = vmatpush1.msra.mxu0 %v98
    %333 = vmatprep.subr.mxu0 %v102
    %334 = vmatpush1.msra.mxu0 %v101
    %335 = vmatprep.subr.mxu0 %v105
    %336 = vmatpush1.msra.mxu0 %v104
    %337 = vmatprep.subr.mxu0 %v108
    %338 = vmatpush1.msra.mxu0 %v107
    %339 = vmatprep.subr.mxu0 %v111
    %340 = vmatpush1.msra.mxu0 %v110
    %341 = vmatprep.subr.mxu0 %v114
    %342 = vmatpush1.msra.mxu0 %v113
    %343 = vmatprep.subr.mxu0 %v117
    %344 = vmatpush1.msra.mxu0 %v116
    %345 = vmatprep.subr.mxu0 %v120
    %346 = vmatpush1.msra.mxu0 %v119
    %347 = vmatprep.mubr.f32.mxu0 %v22
    %348 = vmatmul.mubr.f32.gmra.mrb[0].mxu0 %v21
    %v349 = vpop.f32.mrb[0].mxu0
    %v350 = vadd.f32 %v271, %v349
    %v351 = vpop.f32.mrb[0].mxu0
    %v352 = vadd.f32 %v275, %v351
    %353 = vdwg.mxu0
    %354 = vmatprep.subr.mxu0 %v123
    %355 = vmatpush1.msra.mxu0 %v122
    %356 = vmatprep.subr.mxu0 %v126
    %357 = vmatpush1.msra.mxu0 %v125
    %358 = vmatprep.subr.mxu0 %v129
    %359 = vmatpush1.msra.mxu0 %v128
    %360 = vmatprep.subr.mxu0 %v132
    %361 = vmatpush1.msra.mxu0 %v131
    %362 = vmatprep.subr.mxu0 %v135
    %363 = vmatpush1.msra.mxu0 %v134
    %364 = vmatprep.subr.mxu0 %v138
    %365 = vmatpush1.msra.mxu0 %v137
    %366 = vmatprep.subr.mxu0 %v141
    %367 = vmatpush1.msra.mxu0 %v140
    %368 = vmatprep.subr.mxu0 %v144
    %369 = vmatpush1.msra.mxu0 %v143
    %370 = vmatprep.subr.mxu0 %v147
    %371 = vmatpush1.msra.mxu0 %v146
    %372 = vmatprep.subr.mxu0 %v150
    %373 = vmatpush1.msra.mxu0 %v149
    %374 = vmatprep.subr.mxu0 %v153
    %375 = vmatpush1.msra.mxu0 %v152
    %376 = vmatprep.subr.mxu0 %v156
    %377 = vmatpush1.msra.mxu0 %v155
    %378 = vmatprep.subr.mxu0 %v159
    %379 = vmatpush1.msra.mxu0 %v158
    %380 = vmatprep.subr.mxu0 %v162
    %381 = vmatpush1.msra.mxu0 %v161
    %382 = vmatprep.subr.mxu0 %v165
    %383 = vmatpush1.msra.mxu0 %v164
    %384 = vmatprep.subr.mxu0 %v168
    %385 = vmatpush1.msra.mxu0 %v167
    %386 = vmatprep.subr.mxu0 %v171
    %387 = vmatpush1.msra.mxu0 %v170
    %388 = vmatprep.subr.mxu0 %v174
    %389 = vmatpush1.msra.mxu0 %v173
    %390 = vmatprep.subr.mxu0 %v177
    %391 = vmatpush1.msra.mxu0 %v176
    %392 = vmatprep.subr.mxu0 %v180
    %393 = vmatpush1.msra.mxu0 %v179
    %394 = vmatprep.subr.mxu0 %v183
    %395 = vmatpush1.msra.mxu0 %v182
    %396 = vmatprep.subr.mxu0 %v186
    %397 = vmatpush1.msra.mxu0 %v185
    %398 = vmatprep.subr.mxu0 %v189
    %399 = vmatpush1.msra.mxu0 %v188
    %400 = vmatprep.subr.mxu0 %v192
    %401 = vmatpush1.msra.mxu0 %v191
    %402 = vmatprep.subr.mxu0 %v195
    %403 = vmatpush1.msra.mxu0 %v194
    %404 = vmatprep.subr.mxu0 %v198
    %405 = vmatpush1.msra.mxu0 %v197
    %406 = vmatprep.subr.mxu0 %v201
    %407 = vmatpush1.msra.mxu0 %v200
    %408 = vmatprep.subr.mxu0 %v204
    %409 = vmatpush1.msra.mxu0 %v203
    %410 = vmatprep.subr.mxu0 %v207
    %411 = vmatpush1.msra.mxu0 %v206
    %412 = vmatprep.subr.mxu0 %v210
    %413 = vmatpush1.msra.mxu0 %v209
    %414 = vmatprep.subr.mxu0 %v213
    %415 = vmatpush1.msra.mxu0 %v212
    %416 = vmatprep.subr.mxu0 %v216
    %417 = vmatpush1.msra.mxu0 %v215
    %418 = vmatprep.mubr.f32.mxu0 %v24
    %419 = vmatmul.mubr.f32.gmra.mrb[0].mxu0 %v23
    %v420 = vpop.f32.mrb[0].mxu0
    %v421 = vadd.f32 %v350, %v420
    %v422 = vpop.f32.mrb[0].mxu0
    %v423 = vadd.f32 %v352, %v422
    %424 = vdwg.mxu0
    %425 = vmatprep.subr.mxu0 %v219
    %426 = vmatpush1.msra.mxu0 %v218
    %427 = vmatprep.subr.mxu0 %v222
    %428 = vmatpush1.msra.mxu0 %v221
    %429 = vmatprep.subr.mxu0 %v225
    %430 = vmatpush1.msra.mxu0 %v224
    %431 = vmatprep.subr.mxu0 %v228
    %432 = vmatpush1.msra.mxu0 %v227
    %433 = vmatprep.subr.mxu0 %v231
    %434 = vmatpush1.msra.mxu0 %v230
    %435 = vmatprep.subr.mxu0 %v234
    %436 = vmatpush1.msra.mxu0 %v233
    %437 = vmatprep.subr.mxu0 %v237
    %438 = vmatpush1.msra.mxu0 %v236
    %439 = vmatprep.subr.mxu0 %v240
    %440 = vmatpush1.msra.mxu0 %v239
    %441 = vmatprep.subr.mxu0 %v243
    %442 = vmatpush1.msra.mxu0 %v242
    %443 = vmatprep.subr.mxu0 %v246
    %444 = vmatpush1.msra.mxu0 %v245
    %445 = vmatprep.subr.mxu0 %v249
    %446 = vmatpush1.msra.mxu0 %v248
    %447 = vmatprep.subr.mxu0 %v252
    %448 = vmatpush1.msra.mxu0 %v251
    %449 = vmatprep.subr.mxu0 %v255
    %450 = vmatpush1.msra.mxu0 %v254
    %451 = vmatprep.subr.mxu0 %v258
    %452 = vmatpush1.msra.mxu0 %v257
    %453 = vmatprep.subr.mxu0 %v261
    %454 = vmatpush1.msra.mxu0 %v260
    %455 = vmatprep.subr.mxu0 %v264
    %456 = vmatpush1.msra.mxu0 %v263
    %457 = vmatprep.subr.mxu0 0.0
    %458 = vmatpush1.msra.mxu0 0.0
    %459 = vmatprep.subr.mxu0 0.0
    %460 = vmatpush1.msra.mxu0 0.0
    %461 = vmatprep.subr.mxu0 0.0
    %462 = vmatpush1.msra.mxu0 0.0
    %463 = vmatprep.subr.mxu0 0.0
    %464 = vmatpush1.msra.mxu0 0.0
    %465 = vmatprep.subr.mxu0 0.0
    %466 = vmatpush1.msra.mxu0 0.0
    %467 = vmatprep.subr.mxu0 0.0
    %468 = vmatpush1.msra.mxu0 0.0
    %469 = vmatprep.subr.mxu0 0.0
    %470 = vmatpush1.msra.mxu0 0.0
    %471 = vmatprep.subr.mxu0 0.0
    %472 = vmatpush1.msra.mxu0 0.0
    %473 = vmatprep.subr.mxu0 0.0
    %474 = vmatpush1.msra.mxu0 0.0
    %475 = vmatprep.subr.mxu0 0.0
    %476 = vmatpush1.msra.mxu0 0.0
    %477 = vmatprep.subr.mxu0 0.0
    %478 = vmatpush1.msra.mxu0 0.0
    %479 = vmatprep.subr.mxu0 0.0
    %480 = vmatpush1.msra.mxu0 0.0
    %481 = vmatprep.subr.mxu0 0.0
    %482 = vmatpush1.msra.mxu0 0.0
    %483 = vmatprep.subr.mxu0 0.0
    %484 = vmatpush1.msra.mxu0 0.0
    %485 = vmatprep.subr.mxu0 0.0
    %486 = vmatpush1.msra.mxu0 0.0
    %487 = vmatprep.subr.mxu0 0.0
    %488 = vmatpush1.msra.mxu0 0.0
    %489 = vmatprep.mubr.f32.mxu0 0.0
    %490 = vmatmul.mubr.f32.gmra.mrb[0].mxu0 %v25
    %v491 = vpop.f32.mrb[0].mxu0
    %v492 = vadd.f32 %v421, %v491
    %v493 = vpop.f32.mrb[0].mxu0
    %v494 = vadd.f32 %v423, %v493
    %495 = vdwg.mxu0
    %496 = vmatprep.subr.mxu0 0.0
    %497 = vmatpush1.msra.mxu0 %v28
    %498 = vmatprep.subr.mxu0 0.0
    %499 = vmatpush1.msra.mxu0 %v31
    %500 = vmatprep.subr.mxu0 0.0
    %501 = vmatpush1.msra.mxu0 %v34
    %502 = vmatprep.subr.mxu0 0.0
    %503 = vmatpush1.msra.mxu0 %v37
    %504 = vmatprep.subr.mxu0 0.0
    %505 = vmatpush1.msra.mxu0 %v40
    %506 = vmatprep.subr.mxu0 0.0
    %507 = vmatpush1.msra.mxu0 %v43
    %508 = vmatprep.subr.mxu0 0.0
    %509 = vmatpush1.msra.mxu0 %v46
    %510 = vmatprep.subr.mxu0 0.0
    %511 = vmatpush1.msra.mxu0 %v49
    %512 = vmatprep.subr.mxu0 0.0
    %513 = vmatpush1.msra.mxu0 %v52
    %514 = vmatprep.subr.mxu0 0.0
    %515 = vmatpush1.msra.mxu0 %v55
    %516 = vmatprep.subr.mxu0 0.0
    %517 = vmatpush1.msra.mxu0 %v58
    %518 = vmatprep.subr.mxu0 0.0
    %519 = vmatpush1.msra.mxu0 %v61
    %520 = vmatprep.subr.mxu0 0.0
    %521 = vmatpush1.msra.mxu0 %v64
    %522 = vmatprep.subr.mxu0 0.0
    %523 = vmatpush1.msra.mxu0 %v67
    %524 = vmatprep.subr.mxu0 0.0
    %525 = vmatpush1.msra.mxu0 %v70
    %526 = vmatprep.subr.mxu0 0.0
    %527 = vmatpush1.msra.mxu0 %v73
    %528 = vmatprep.subr.mxu0 0.0
    %529 = vmatpush1.msra.mxu0 %v76
    %530 = vmatprep.subr.mxu0 0.0
    %531 = vmatpush1.msra.mxu0 %v79
    %532 = vmatprep.subr.mxu0 0.0
    %533 = vmatpush1.msra.mxu0 %v82
    %534 = vmatprep.subr.mxu0 0.0
    %535 = vmatpush1.msra.mxu0 %v85
    %536 = vmatprep.subr.mxu0 0.0
    %537 = vmatpush1.msra.mxu0 %v88
    %538 = vmatprep.subr.mxu0 0.0
    %539 = vmatpush1.msra.mxu0 %v91
    %540 = vmatprep.subr.mxu0 0.0
    %541 = vmatpush1.msra.mxu0 %v94
    %542 = vmatprep.subr.mxu0 0.0
    %543 = vmatpush1.msra.mxu0 %v97
    %544 = vmatprep.subr.mxu0 0.0
    %545 = vmatpush1.msra.mxu0 %v100
    %546 = vmatprep.subr.mxu0 0.0
    %547 = vmatpush1.msra.mxu0 %v103
    %548 = vmatprep.subr.mxu0 0.0
    %549 = vmatpush1.msra.mxu0 %v106
    %550 = vmatprep.subr.mxu0 0.0
    %551 = vmatpush1.msra.mxu0 %v109
    %552 = vmatprep.subr.mxu0 0.0
    %553 = vmatpush1.msra.mxu0 %v112
    %554 = vmatprep.subr.mxu0 0.0
    %555 = vmatpush1.msra.mxu0 %v115
    %556 = vmatprep.subr.mxu0 0.0
    %557 = vmatpush1.msra.mxu0 %v118
    %558 = vmatprep.subr.mxu0 0.0
    %559 = vmatpush1.msra.mxu0 %v121
    %560 = vmatprep.mubr.f32.mxu0 %v22
    %561 = vmatmul.mubr.f32.gmra.mrb[0].mxu0 %v21
    %v562 = vpop.f32.mrb[0].mxu0
    %v563 = vadd.f32 %v279, %v562
    %v564 = vpop.f32.mrb[0].mxu0
    %565 = vdwg.mxu0
    %566 = vmatprep.subr.mxu0 0.0
    %567 = vmatpush1.msra.mxu0 %v124
    %568 = vmatprep.subr.mxu0 0.0
    %569 = vmatpush1.msra.mxu0 %v127
    %570 = vmatprep.subr.mxu0 0.0
    %571 = vmatpush1.msra.mxu0 %v130
    %572 = vmatprep.subr.mxu0 0.0
    %573 = vmatpush1.msra.mxu0 %v133
    %574 = vmatprep.subr.mxu0 0.0
    %575 = vmatpush1.msra.mxu0 %v136
    %576 = vmatprep.subr.mxu0 0.0
    %577 = vmatpush1.msra.mxu0 %v139
    %578 = vmatprep.subr.mxu0 0.0
    %579 = vmatpush1.msra.mxu0 %v142
    %580 = vmatprep.subr.mxu0 0.0
    %581 = vmatpush1.msra.mxu0 %v145
    %582 = vmatprep.subr.mxu0 0.0
    %583 = vmatpush1.msra.mxu0 %v148
    %584 = vmatprep.subr.mxu0 0.0
    %585 = vmatpush1.msra.mxu0 %v151
    %586 = vmatprep.subr.mxu0 0.0
    %587 = vmatpush1.msra.mxu0 %v154
    %588 = vmatprep.subr.mxu0 0.0
    %589 = vmatpush1.msra.mxu0 %v157
    %590 = vmatprep.subr.mxu0 0.0
    %591 = vmatpush1.msra.mxu0 %v160
    %592 = vmatprep.subr.mxu0 0.0
    %593 = vmatpush1.msra.mxu0 %v163
    %594 = vmatprep.subr.mxu0 0.0
    %595 = vmatpush1.msra.mxu0 %v166
    %596 = vmatprep.subr.mxu0 0.0
    %597 = vmatpush1.msra.mxu0 %v169
    %598 = vmatprep.subr.mxu0 0.0
    %599 = vmatpush1.msra.mxu0 %v172
    %600 = vmatprep.subr.mxu0 0.0
    %601 = vmatpush1.msra.mxu0 %v175
    %602 = vmatprep.subr.mxu0 0.0
    %603 = vmatpush1.msra.mxu0 %v178
    %604 = vmatprep.subr.mxu0 0.0
    %605 = vmatpush1.msra.mxu0 %v181
    %606 = vmatprep.subr.mxu0 0.0
    %607 = vmatpush1.msra.mxu0 %v184
    %608 = vmatprep.subr.mxu0 0.0
    %609 = vmatpush1.msra.mxu0 %v187
    %610 = vmatprep.subr.mxu0 0.0
    %611 = vmatpush1.msra.mxu0 %v190
    %612 = vmatprep.subr.mxu0 0.0
    %613 = vmatpush1.msra.mxu0 %v193
    %614 = vmatprep.subr.mxu0 0.0
    %615 = vmatpush1.msra.mxu0 %v196
    %616 = vmatprep.subr.mxu0 0.0
    %617 = vmatpush1.msra.mxu0 %v199
    %618 = vmatprep.subr.mxu0 0.0
    %619 = vmatpush1.msra.mxu0 %v202
    %620 = vmatprep.subr.mxu0 0.0
    %621 = vmatpush1.msra.mxu0 %v205
    %622 = vmatprep.subr.mxu0 0.0
    %623 = vmatpush1.msra.mxu0 %v208
    %624 = vmatprep.subr.mxu0 0.0
    %625 = vmatpush1.msra.mxu0 %v211
    %626 = vmatprep.subr.mxu0 0.0
    %627 = vmatpush1.msra.mxu0 %v214
    %628 = vmatprep.subr.mxu0 0.0
    %629 = vmatpush1.msra.mxu0 %v217
    %630 = vmatprep.mubr.f32.mxu0 %v24
    %631 = vmatmul.mubr.f32.gmra.mrb[0].mxu0 %v23
    %v632 = vpop.f32.mrb[0].mxu0
    %v633 = vadd.f32 %v563, %v632
    %v634 = vpop.f32.mrb[0].mxu0
    %635 = vdwg.mxu0
    %636 = vmatprep.subr.mxu0 0.0
    %637 = vmatpush1.msra.mxu0 %v220
    %638 = vmatprep.subr.mxu0 0.0
    %639 = vmatpush1.msra.mxu0 %v223
    %640 = vmatprep.subr.mxu0 0.0
    %641 = vmatpush1.msra.mxu0 %v226
    %642 = vmatprep.subr.mxu0 0.0
    %643 = vmatpush1.msra.mxu0 %v229
    %644 = vmatprep.subr.mxu0 0.0
    %645 = vmatpush1.msra.mxu0 %v232
    %646 = vmatprep.subr.mxu0 0.0
    %647 = vmatpush1.msra.mxu0 %v235
    %648 = vmatprep.subr.mxu0 0.0
    %649 = vmatpush1.msra.mxu0 %v238
    %650 = vmatprep.subr.mxu0 0.0
    %651 = vmatpush1.msra.mxu0 %v241
    %652 = vmatprep.subr.mxu0 0.0
    %653 = vmatpush1.msra.mxu0 %v244
    %654 = vmatprep.subr.mxu0 0.0
    %655 = vmatpush1.msra.mxu0 %v247
    %656 = vmatprep.subr.mxu0 0.0
    %657 = vmatpush1.msra.mxu0 %v250
    %658 = vmatprep.subr.mxu0 0.0
    %659 = vmatpush1.msra.mxu0 %v253
    %660 = vmatprep.subr.mxu0 0.0
    %661 = vmatpush1.msra.mxu0 %v256
    %662 = vmatprep.subr.mxu0 0.0
    %663 = vmatpush1.msra.mxu0 %v259
    %664 = vmatprep.subr.mxu0 0.0
    %665 = vmatpush1.msra.mxu0 %v262
    %666 = vmatprep.subr.mxu0 0.0
    %667 = vmatpush1.msra.mxu0 %v265
    %668 = vmatprep.subr.mxu0 0.0
    %669 = vmatpush1.msra.mxu0 0.0
    %670 = vmatprep.subr.mxu0 0.0
    %671 = vmatpush1.msra.mxu0 0.0
    %672 = vmatprep.subr.mxu0 0.0
    %673 = vmatpush1.msra.mxu0 0.0
    %674 = vmatprep.subr.mxu0 0.0
    %675 = vmatpush1.msra.mxu0 0.0
    %676 = vmatprep.subr.mxu0 0.0
    %677 = vmatpush1.msra.mxu0 0.0
    %678 = vmatprep.subr.mxu0 0.0
    %679 = vmatpush1.msra.mxu0 0.0
    %680 = vmatprep.subr.mxu0 0.0
    %681 = vmatpush1.msra.mxu0 0.0
    %682 = vmatprep.subr.mxu0 0.0
    %683 = vmatpush1.msra.mxu0 0.0
    %684 = vmatprep.subr.mxu0 0.0
    %685 = vmatpush1.msra.mxu0 0.0
    %686 = vmatprep.subr.mxu0 0.0
    %687 = vmatpush1.msra.mxu0 0.0
    %688 = vmatprep.subr.mxu0 0.0
    %689 = vmatpush1.msra.mxu0 0.0
    %690 = vmatprep.subr.mxu0 0.0
    %691 = vmatpush1.msra.mxu0 0.0
    %692 = vmatprep.subr.mxu0 0.0
    %693 = vmatpush1.msra.mxu0 0.0
    %694 = vmatprep.subr.mxu0 0.0
    %695 = vmatpush1.msra.mxu0 0.0
    %696 = vmatprep.subr.mxu0 0.0
    %697 = vmatpush1.msra.mxu0 0.0
    %698 = vmatprep.subr.mxu0 0.0
    %699 = vmatpush1.msra.mxu0 0.0
    %700 = vmatprep.mubr.f32.mxu0 0.0
    %701 = vmatmul.mubr.f32.gmra.mrb[0].mxu0 %v25
    %v702 = vpop.f32.mrb[0].mxu0
    %v703 = vadd.f32 %v633, %v702
    %v704 = vpop.f32.mrb[0].mxu0
    %705 = vdwg.mxu0
    %v706 = vmax.f32 %v492, 0.0
    %v707 = vmax.f32 %v494, 0.0
    %v708 = vmax.f32 %v703, 0.0
    %v709 = vld [vmem:[%s3] sm:$0xff]
    %v710 = vld [vmem:[%s3 + $0x8] sm:$0xff]
    %v711 = vld [vmem:[%s3 + $0x10] sm:$0xff]
    %v712 = vld [vmem:[%s3 + $0x18] sm:$0xff]
    %v713 = vld [vmem:[%s3 + $0x20] sm:$0xff]
    %v714 = vld [vmem:[%s3 + $0x28] sm:$0xff]
    %v715 = vld [vmem:[%s3 + $0x30] sm:$0xff]
    %v716 = vld [vmem:[%s3 + $0x38] sm:$0xff]
    %v717 = vld [vmem:[%s3 + $0x40] sm:$0xff]
    %v718 = vld [vmem:[%s3 + $0x48] sm:$0xff]
    %v719 = vld [vmem:[%s3 + $0x50] sm:$0xff]
    %v720 = vld [vmem:[%s3 + $0x58] sm:$0xff]
    %v721 = vld [vmem:[%s3 + $0x60] sm:$0xff]
    %v722 = vld [vmem:[%s3 + $0x68] sm:$0xff]
    %v723 = vld [vmem:[%s3 + $0x70] sm:$0xff]
    %v724 = vld [vmem:[%s3 + $0x78] sm:$0xff]
    %v725 = vld [vmem:[%s3 + $0x80] sm:$0xff]
    %v726 = vld [vmem:[%s3 + $0x88] sm:$0xff]
    %v727 = vld [vmem:[%s3 + $0x90] sm:$0xff]
    %v728 = vld [vmem:[%s3 + $0x98] sm:$0xff]
    %v729 = vld [vmem:[%s3 + $0xa0] sm:$0xff]
    %v730 = vld [vmem:[%s3 + $0xa8] sm:$0xff]
    %v731 = vld [vmem:[%s3 + $0xb0] sm:$0xff]
    %v732 = vld [vmem:[%s3 + $0xb8] sm:$0xff]
    %v733 = vld [vmem:[%s3 + $0xc0] sm:$0xff]
    %v734 = vld [vmem:[%s3 + $0xc8] sm:$0xff]
    %v735 = vld [vmem:[%s3 + $0xd0] sm:$0xff]
    %v736 = vld [vmem:[%s3 + $0xd8] sm:$0xff]
    %v737 = vld [vmem:[%s3 + $0xe0] sm:$0xff]
    %v738 = vld [vmem:[%s3 + $0xe8] sm:$0xff]
    %v739 = vld [vmem:[%s3 + $0xf0] sm:$0xff]
    %v740 = vld [vmem:[%s3 + $0xf8] sm:$0xff]
    %v741 = vld [vmem:[%s3 + $0x100] sm:$0xff]
    %v742 = vld [vmem:[%s3 + $0x108] sm:$0xff]
    %v743 = vld [vmem:[%s3 + $0x110] sm:$0xff]
    %v744 = vld [vmem:[%s3 + $0x118] sm:$0xff]
    %v745 = vld [vmem:[%s3 + $0x120] sm:$0xff]
    %v746 = vld [vmem:[%s3 + $0x128] sm:$0xff]
    %v747 = vld [vmem:[%s3 + $0x130] sm:$0xff]
    %v748 = vld [vmem:[%s3 + $0x138] sm:$0xff]
    %v749 = vld [vmem:[%s4] sm:$0x1]
    %v751 = vlaneseq
    %v752 = vshrl.u32 %v751, 7
    %v753 = vsub.s32 0, %v752
    %v754 = vrot.slane %v749, %v753
    %vm756 = vcmask 523264
    %v758 = vsel %vm756, %v708, 0
    %760 = vmatprep.subr.mxu0 0.0
    %761 = vmatpush1.msra.mxu0 %v709
    %762 = vmatprep.subr.mxu0 0.0
    %763 = vmatpush1.msra.mxu0 %v710
    %764 = vmatprep.subr.mxu0 0.0
    %765 = vmatpush1.msra.mxu0 %v711
    %766 = vmatprep.subr.mxu0 0.0
    %767 = vmatpush1.msra.mxu0 %v712
    %768 = vmatprep.subr.mxu0 0.0
    %769 = vmatpush1.msra.mxu0 %v713
    %770 = vmatprep.subr.mxu0 0.0
    %771 = vmatpush1.msra.mxu0 %v714
    %772 = vmatprep.subr.mxu0 0.0
    %773 = vmatpush1.msra.mxu0 %v715
    %774 = vmatprep.subr.mxu0 0.0
    %775 = vmatpush1.msra.mxu0 %v716
    %776 = vmatprep.subr.mxu0 0.0
    %777 = vmatpush1.msra.mxu0 %v717
    %778 = vmatprep.subr.mxu0 0.0
    %779 = vmatpush1.msra.mxu0 %v718
    %780 = vmatprep.subr.mxu0 0.0
    %781 = vmatpush1.msra.mxu0 %v719
    %782 = vmatprep.subr.mxu0 0.0
    %783 = vmatpush1.msra.mxu0 %v720
    %784 = vmatprep.subr.mxu0 0.0
    %785 = vmatpush1.msra.mxu0 %v721
    %786 = vmatprep.subr.mxu0 0.0
    %787 = vmatpush1.msra.mxu0 %v722
    %788 = vmatprep.subr.mxu0 0.0
    %789 = vmatpush1.msra.mxu0 %v723
    %790 = vmatprep.subr.mxu0 0.0
    %791 = vmatpush1.msra.mxu0 %v724
    %792 = vmatprep.subr.mxu0 0.0
    %793 = vmatpush1.msra.mxu0 %v725
    %794 = vmatprep.subr.mxu0 0.0
    %795 = vmatpush1.msra.mxu0 %v726
    %796 = vmatprep.subr.mxu0 0.0
    %797 = vmatpush1.msra.mxu0 %v727
    %798 = vmatprep.subr.mxu0 0.0
    %799 = vmatpush1.msra.mxu0 %v728
    %800 = vmatprep.subr.mxu0 0.0
    %801 = vmatpush1.msra.mxu0 %v729
    %802 = vmatprep.subr.mxu0 0.0
    %803 = vmatpush1.msra.mxu0 %v730
    %804 = vmatprep.subr.mxu0 0.0
    %805 = vmatpush1.msra.mxu0 %v731
    %806 = vmatprep.subr.mxu0 0.0
    %807 = vmatpush1.msra.mxu0 %v732
    %808 = vmatprep.subr.mxu0 0.0
    %809 = vmatpush1.msra.mxu0 %v733
    %810 = vmatprep.subr.mxu0 0.0
    %811 = vmatpush1.msra.mxu0 %v734
    %812 = vmatprep.subr.mxu0 0.0
    %813 = vmatpush1.msra.mxu0 %v735
    %814 = vmatprep.subr.mxu0 0.0
    %815 = vmatpush1.msra.mxu0 %v736
    %816 = vmatprep.subr.mxu0 0.0
    %817 = vmatpush1.msra.mxu0 %v737
    %818 = vmatprep.subr.mxu0 0.0
    %819 = vmatpush1.msra.mxu0 %v738
    %820 = vmatprep.subr.mxu0 0.0
    %821 = vmatpush1.msra.mxu0 %v739
    %822 = vmatprep.subr.mxu0 0.0
    %823 = vmatpush1.msra.mxu0 %v740
    %824 = vmatprep.mubr.f32.mxu0 %v707
    %825 = vmatmul.mubr.f32.gmra.mrb[0].mxu0 %v706
    %v826 = vpop.f32.mrb[0].mxu0
    %v827 = vadd.f32 %v754, %v826
    %v828 = vpop.f32.mrb[0].mxu0
    %829 = vdwg.mxu0
    %830 = vmatprep.subr.mxu0 0.0
    %831 = vmatpush1.msra.mxu0 %v741
    %832 = vmatprep.subr.mxu0 0.0
    %833 = vmatpush1.msra.mxu0 %v742
    %834 = vmatprep.subr.mxu0 0.0
    %835 = vmatpush1.msra.mxu0 %v743
    %836 = vmatprep.subr.mxu0 0.0
    %837 = vmatpush1.msra.mxu0 %v744
    %838 = vmatprep.subr.mxu0 0.0
    %839 = vmatpush1.msra.mxu0 %v745
    %840 = vmatprep.subr.mxu0 0.0
    %841 = vmatpush1.msra.mxu0 %v746
    %842 = vmatprep.subr.mxu0 0.0
    %843 = vmatpush1.msra.mxu0 %v747
    %844 = vmatprep.subr.mxu0 0.0
    %845 = vmatpush1.msra.mxu0 %v748
    %846 = vmatprep.subr.mxu0 0.0
    %847 = vmatpush1.msra.mxu0 0.0
    %848 = vmatprep.subr.mxu0 0.0
    %849 = vmatpush1.msra.mxu0 0.0
    %850 = vmatprep.subr.mxu0 0.0
    %851 = vmatpush1.msra.mxu0 0.0
    %852 = vmatprep.subr.mxu0 0.0
    %853 = vmatpush1.msra.mxu0 0.0
    %854 = vmatprep.subr.mxu0 0.0
    %855 = vmatpush1.msra.mxu0 0.0
    %856 = vmatprep.subr.mxu0 0.0
    %857 = vmatpush1.msra.mxu0 0.0
    %858 = vmatprep.subr.mxu0 0.0
    %859 = vmatpush1.msra.mxu0 0.0
    %860 = vmatprep.subr.mxu0 0.0
    %861 = vmatpush1.msra.mxu0 0.0
    %862 = vmatprep.subr.mxu0 0.0
    %863 = vmatpush1.msra.mxu0 0.0
    %864 = vmatprep.subr.mxu0 0.0
    %865 = vmatpush1.msra.mxu0 0.0
    %866 = vmatprep.subr.mxu0 0.0
    %867 = vmatpush1.msra.mxu0 0.0
    %868 = vmatprep.subr.mxu0 0.0
    %869 = vmatpush1.msra.mxu0 0.0
    %870 = vmatprep.subr.mxu0 0.0
    %871 = vmatpush1.msra.mxu0 0.0
    %872 = vmatprep.subr.mxu0 0.0
    %873 = vmatpush1.msra.mxu0 0.0
    %874 = vmatprep.subr.mxu0 0.0
    %875 = vmatpush1.msra.mxu0 0.0
    %876 = vmatprep.subr.mxu0 0.0
    %877 = vmatpush1.msra.mxu0 0.0
    %878 = vmatprep.subr.mxu0 0.0
    %879 = vmatpush1.msra.mxu0 0.0
    %880 = vmatprep.subr.mxu0 0.0
    %881 = vmatpush1.msra.mxu0 0.0
    %882 = vmatprep.subr.mxu0 0.0
    %883 = vmatpush1.msra.mxu0 0.0
    %884 = vmatprep.subr.mxu0 0.0
    %885 = vmatpush1.msra.mxu0 0.0
    %886 = vmatprep.subr.mxu0 0.0
    %887 = vmatpush1.msra.mxu0 0.0
    %888 = vmatprep.subr.mxu0 0.0
    %889 = vmatpush1.msra.mxu0 0.0
    %890 = vmatprep.subr.mxu0 0.0
    %891 = vmatpush1.msra.mxu0 0.0
    %892 = vmatprep.subr.mxu0 0.0
    %893 = vmatpush1.msra.mxu0 0.0
    %894 = vmatprep.mubr.f32.mxu0 0.0
    %895 = vmatmul.mubr.f32.gmra.mrb[0].mxu0 %v758
    %v896 = vpop.f32.mrb[0].mxu0
    %v897 = vadd.f32 %v827, %v896
    %v898 = vpop.f32.mrb[0].mxu0
    %899 = vdwg.mxu0
    %v900 = vxor.u32 %v897, 2147483648
    %v901 = vmul.f32 %v900, 1.442695
    %v902 = vpow.pop %v901
    %v903 = vadd.f32 %v902, 1.0
    %v904 = vrcp.pop %v903
    %v905 = vmul.f32 1.0, %v904
    %906 = vst.msk [vmem:[#allocation2] sm:$0xff] %vm756, %v905
    // Predicated region
    $region22: #{tpu_custom_call.1} parent=1 // pred_check
      _
    $region23: #{tpu_custom_call.1} parent=1 // pred_check_branch
      %908 = sbr.rel (0) target = $region25
    $region24: #{tpu_custom_call.1} parent=1 // pred_region
      %s910 = ssub.s32 128, 128
      %911 = vsyncadd [#allocation3], %s910
      %s913 = sshll.u32 [#allocation2], 4
      %s914 = int_to_ptr.vmem [resolvable:$true] %s913
      %916 = dma.vmem_to_hbm [thread:$0]  %s914, 128, %s5, [#allocation3]
    $region25: #{tpu_custom_call.1} parent=1 // pred_fallthru
      _
    // Predicated region
    $region26: #{tpu_custom_call.1} parent=1 // pred_check
      _
    $region27: #{tpu_custom_call.1} parent=1 // pred_check_branch
      %918 = sbr.rel (0) target = $region29
    $region28: #{tpu_custom_call.1} parent=1 // pred_region
      %919 = dma.done [#allocation3], 128
    $region29: #{tpu_custom_call.1} parent=1 // pred_fallthru
      _
    %920 = vsyncpa [#allocation3], 1

</llo_original>
